<compile_context>
chip_gen: v6e
topology: v6e:2x2x1
jax: 0.10.0
libtpu: 0.0.40
codegen_flags: <defaults>
</compile_context>

<pallas_src>
import functools

import jax
import jax.numpy as jnp
from jax.experimental import pallas as pl
from jax.experimental.pallas import tpu as pltpu


def _ergas_sums_kernel(x_ref, y_ref, lsum_ref, esum_ref, lacc_ref, eacc_ref):
    # x_ref / y_ref : (C, tH, W) tile of outputs / labels (native dtype)
    # lsum_ref      : (C, 1) raw per-band sum of labels for this (b, split)
    # esum_ref      : (C, 1) raw per-band sum of (outputs - labels)^2
    # lacc_ref/eacc_ref : (C, 1) f32 VMEM accumulators (persist across tiles)
    t = pl.program_id(2)

    @pl.when(t == 0)
    def _():
        lacc_ref[...] = jnp.zeros_like(lacc_ref)
        eacc_ref[...] = jnp.zeros_like(eacc_ref)

    # Widen in-vreg: stream native (e.g. bf16) bytes from HBM, accumulate f32.
    x = x_ref[...].astype(jnp.float32)
    y = y_ref[...].astype(jnp.float32)
    d = x - y
    # Lane reduce (W) then sublane reduce (tH); stays on >=2-D shapes.
    lacc_ref[...] += jnp.sum(jnp.sum(y, axis=2), axis=1, keepdims=True)
    eacc_ref[...] += jnp.sum(jnp.sum(d * d, axis=2), axis=1, keepdims=True)

    @pl.when(t == pl.num_programs(2) - 1)
    def _():
        lsum_ref[...] = lacc_ref[...]
        esum_ref[...] = eacc_ref[...]


def _choose_tiling(H, C, W, itemsize, target_tile_bytes=4 << 20):
    """Pick (n_splits, tH): parallel H-splits and row-tile height.

    tH must be a multiple of 8 dividing H // n_splits (or all of H when H is
    not 8-aligned).  Per-input tile bytes are capped so 2 inputs x 2 pipeline
    buffers stay well inside v7x's 64 MiB VMEM / 32 MiB scoped default.
    """
    if H % 8 != 0:
        return 1, H  # whole-H block: allowed because it equals the array dim
    n_splits = 2 if (H % 16 == 0 and H >= 16) else 1
    h_split = H // n_splits
    divisors = [d for d in range(8, h_split + 1, 8) if h_split % d == 0]
    fitting = [d for d in divisors if C * d * W * itemsize <= target_tile_bytes]
    tH = max(fitting) if fitting else min(divisors)
    return n_splits, tH


def _combine(labels_mean, error, ratio, nbands, reduction):
    # NOTE: division by labels_mean**2 matches the PyTorch reference exactly;
    # a band with (near-)zero spatial mean yields inf/nan, as in the original.
    mu = labels_mean ** 2
    ergas_index = (100.0 / ratio) * jnp.sqrt(jnp.sum(error / mu, axis=1) / nbands)
    if reduction == "mean":
        return jnp.mean(ergas_index)
    return jnp.sum(ergas_index)


def ergas(outputs, labels, *, ratio, reduction="mean", min_pallas_elements=1 << 20):
    """Pallas/JAX equivalent of ERGAS.forward(outputs, labels)."""
    B, C, H, W = labels.shape

    if labels.size < min_pallas_elements:
        # Tiny planes: per-step grid overhead + launch dominates; plain XLA wins.
        lbl32 = labels.astype(jnp.float32)
        out32 = outputs.astype(jnp.float32)
        labels_mean = jnp.mean(lbl32, axis=(2, 3))
        error = jnp.mean((out32 - lbl32) ** 2, axis=(2, 3))
        return _combine(labels_mean, error, ratio, C, reduction)

    itemsize = jnp.dtype(labels.dtype).itemsize
    S, tH = _choose_tiling(H, C, W, itemsize)
    T = (H // S) // tH
    inv_hw = 1.0 / float(H * W)

    flops = 4 * B * C * H * W
    bytes_accessed = 2 * B * C * H * W * itemsize + 2 * B * S * C * 4

    lsum, esum = pl.pallas_call(
        _ergas_sums_kernel,
        out_shape=(
            jax.ShapeDtypeStruct((B, S, C, 1), jnp.float32),
            jax.ShapeDtypeStruct((B, S, C, 1), jnp.float32),
        ),
        grid=(B, S, T),
        in_specs=[
            pl.BlockSpec((None, C, tH, W), lambda b, s, t: (b, 0, s * T + t, 0)),
            pl.BlockSpec((None, C, tH, W), lambda b, s, t: (b, 0, s * T + t, 0)),
        ],
        out_specs=(
            pl.BlockSpec((None, None, C, 1), lambda b, s, t: (b, s, 0, 0)),
            pl.BlockSpec((None, None, C, 1), lambda b, s, t: (b, s, 0, 0)),
        ),
        scratch_shapes=[
            pltpu.VMEM((C, 1), jnp.float32),
            pltpu.VMEM((C, 1), jnp.float32),
        ],
        compiler_params=pltpu.CompilerParams(
            dimension_semantics=("parallel", "parallel", "arbitrary")),
        cost_estimate=pl.CostEstimate(
            flops=flops, transcendentals=0, bytes_accessed=bytes_accessed),
    )(outputs, labels)

    labels_mean = jnp.sum(lsum[..., 0], axis=1) * inv_hw   # (B, C)
    error = jnp.sum(esum[..., 0], axis=1) * inv_hw          # (B, C)
    return _combine(labels_mean, error, ratio, C, reduction)


if __name__ == "__main__":
    key = jax.random.PRNGKey(0)
    B, C, H, W, ratio = 2, 4, 16, 16, 4

    k1, k2 = jax.random.split(key)
    outputs = jax.random.uniform(k1, (B, C, H, W), dtype=jnp.float32)
    # Shift labels away from zero mean so mu > 0 (mirrors typical image data).
    labels = jax.random.uniform(k2, (B, C, H, W), dtype=jnp.float32) + 0.5

    # Pure-JAX reference of the PyTorch forward.
    mu_ref = jnp.mean(labels, axis=(2, 3)) ** 2
    err_ref = jnp.mean((outputs - labels) ** 2, axis=(2, 3))
    ref = jnp.mean((100.0 / ratio) * jnp.sqrt(jnp.sum(err_ref / mu_ref, axis=1) / C))

    # 1) Force the Pallas path (even at this small test shape) and check it.
    result = jax.jit(
        functools.partial(ergas, ratio=ratio, min_pallas_elements=0)
    )(outputs, labels)
    jax.block_until_ready(result)
    assert result.shape == ()
    assert jnp.allclose(result, ref, rtol=1e-4, atol=1e-5)

    # 2) Default call exercises the small-input XLA fast path.
    fast = jax.jit(functools.partial(ergas, ratio=ratio))(outputs, labels)
    jax.block_until_ready(fast)
    assert jnp.allclose(fast, ref, rtol=1e-4, atol=1e-5)

    # 3) bf16 inputs stream natively and are widened in-kernel.
    out_bf = outputs.astype(jnp.bfloat16)
    lab_bf = labels.astype(jnp.bfloat16)
    res_bf = jax.jit(
        functools.partial(ergas, ratio=ratio, min_pallas_elements=0)
    )(out_bf, lab_bf)
    jax.block_until_ready(res_bf)
    lab32 = lab_bf.astype(jnp.float32)
    out32 = out_bf.astype(jnp.float32)
    mu_bf = jnp.mean(lab32, axis=(2, 3)) ** 2
    err_bf = jnp.mean((out32 - lab32) ** 2, axis=(2, 3))
    ref_bf = jnp.mean((100.0 / ratio) * jnp.sqrt(jnp.sum(err_bf / mu_bf, axis=1) / C))
    assert jnp.allclose(res_bf, ref_bf, rtol=2e-2, atol=1e-3)

    print("KERNEL_OK")
</pallas_src>

<mosaic_0001>
module attributes {stable_mosaic.version = 11 : i64} {
  func.func @_ergas_sums_kernel(%arg0: i32, %arg1: i32, %arg2: i32, %arg3: memref<1x4x8x16xf32, #tpu.memory_space<vmem>>, %arg4: memref<1x4x8x16xf32, #tpu.memory_space<vmem>>, %arg5: memref<1x1x4x1xf32, #tpu.memory_space<vmem>>, %arg6: memref<1x1x4x1xf32, #tpu.memory_space<vmem>>, %arg7: memref<4x1xf32, #tpu.memory_space<vmem>>, %arg8: memref<4x1xf32, #tpu.memory_space<vmem>>) attributes {dimension_semantics = [#tpu.dimension_semantics<parallel>, #tpu.dimension_semantics<parallel>, #tpu.dimension_semantics<arbitrary>], iteration_bounds = array<i64: 2, 2, 1>, scalar_prefetch = 0 : i64, scratch_operands = 2 : i64, tpu.core_type = #tpu.core_type<tc>, window_params = [{transform_indices = @transform_0, window_bounds = array<i64: 1, 4, 8, 16>}, {transform_indices = @transform_1, window_bounds = array<i64: 1, 4, 8, 16>}, {transform_indices = @transform_2, window_bounds = array<i64: 1, 1, 4, 1>}, {transform_indices = @transform_3, window_bounds = array<i64: 1, 1, 4, 1>}]} {
    %c0_i32 = arith.constant 0 : i32
    %0 = arith.cmpi eq, %arg2, %c0_i32 : i32
    %1 = arith.extui %0 : i1 to i32
    %c0_i32_0 = arith.constant 0 : i32
    %2 = arith.cmpi ne, %1, %c0_i32_0 : i32
    scf.if %2 {
      %cst_21 = arith.constant 0.000000e+00 : f32
      %24 = vector.broadcast %cst_21 : f32 to vector<4x1xf32>
      %c0_22 = arith.constant 0 : index
      %c0_23 = arith.constant 0 : index
      %25 = vector.load %arg7[%c0_22, %c0_23] : memref<4x1xf32, #tpu.memory_space<vmem>>, vector<4x1xf32>
      tpu.vector_store %arg7[%c0_22, %c0_23], %24 {strides = array<i32>} : memref<4x1xf32, #tpu.memory_space<vmem>>, vector<4x1xf32>,
      %cst_24 = arith.constant 0.000000e+00 : f32
      %26 = vector.broadcast %cst_24 : f32 to vector<4x1xf32>
      %c0_25 = arith.constant 0 : index
      %c0_26 = arith.constant 0 : index
      %27 = vector.load %arg8[%c0_25, %c0_26] : memref<4x1xf32, #tpu.memory_space<vmem>>, vector<4x1xf32>
      tpu.vector_store %arg8[%c0_25, %c0_26], %26 {strides = array<i32>} : memref<4x1xf32, #tpu.memory_space<vmem>>, vector<4x1xf32>,
    } else {
    }
    %c0 = arith.constant 0 : index
    %c0_1 = arith.constant 0 : index
    %c0_2 = arith.constant 0 : index
    %c0_3 = arith.constant 0 : index
    %3 = vector.load %arg3[%c0, %c0_1, %c0_2, %c0_3] : memref<1x4x8x16xf32, #tpu.memory_space<vmem>>, vector<1x4x8x16xf32>
    %4 = vector.shape_cast %3 : vector<1x4x8x16xf32> to vector<4x8x16xf32>
    %c0_4 = arith.constant 0 : index
    %c0_5 = arith.constant 0 : index
    %c0_6 = arith.constant 0 : index
    %c0_7 = arith.constant 0 : index
    %5 = vector.load %arg4[%c0_4, %c0_5, %c0_6, %c0_7] : memref<1x4x8x16xf32, #tpu.memory_space<vmem>>, vector<1x4x8x16xf32>
    %6 = vector.shape_cast %5 : vector<1x4x8x16xf32> to vector<4x8x16xf32>
    %7 = arith.subf %4, %6 : vector<4x8x16xf32>
    %c0_8 = arith.constant 0 : index
    %c0_9 = arith.constant 0 : index
    %8 = vector.load %arg7[%c0_8, %c0_9] : memref<4x1xf32, #tpu.memory_space<vmem>>, vector<4x1xf32>
    %cst = arith.constant dense<0.000000e+00> : vector<4x8xf32>
    %9 = vector.multi_reduction <add>, %6, %cst [2] : vector<4x8x16xf32> to vector<4x8xf32>
    %cst_10 = arith.constant dense<0.000000e+00> : vector<4xf32>
    %10 = vector.multi_reduction <add>, %9, %cst_10 [1] : vector<4x8xf32> to vector<4xf32>
    %11 = vector.shape_cast %10 : vector<4xf32> to vector<4x1xf32>
    %12 = arith.addf %8, %11 : vector<4x1xf32>
    %c0_11 = arith.constant 0 : index
    %c0_12 = arith.constant 0 : index
    %13 = vector.load %arg7[%c0_11, %c0_12] : memref<4x1xf32, #tpu.memory_space<vmem>>, vector<4x1xf32>
    tpu.vector_store %arg7[%c0_11, %c0_12], %12 {strides = array<i32>} : memref<4x1xf32, #tpu.memory_space<vmem>>, vector<4x1xf32>,
    %c0_13 = arith.constant 0 : index
    %c0_14 = arith.constant 0 : index
    %14 = vector.load %arg8[%c0_13, %c0_14] : memref<4x1xf32, #tpu.memory_space<vmem>>, vector<4x1xf32>
    %15 = arith.mulf %7, %7 : vector<4x8x16xf32>
    %cst_15 = arith.constant dense<0.000000e+00> : vector<4x8xf32>
    %16 = vector.multi_reduction <add>, %15, %cst_15 [2] : vector<4x8x16xf32> to vector<4x8xf32>
    %cst_16 = arith.constant dense<0.000000e+00> : vector<4xf32>
    %17 = vector.multi_reduction <add>, %16, %cst_16 [1] : vector<4x8xf32> to vector<4xf32>
    %18 = vector.shape_cast %17 : vector<4xf32> to vector<4x1xf32>
    %19 = arith.addf %14, %18 : vector<4x1xf32>
    %c0_17 = arith.constant 0 : index
    %c0_18 = arith.constant 0 : index
    %20 = vector.load %arg8[%c0_17, %c0_18] : memref<4x1xf32, #tpu.memory_space<vmem>>, vector<4x1xf32>
    tpu.vector_store %arg8[%c0_17, %c0_18], %19 {strides = array<i32>} : memref<4x1xf32, #tpu.memory_space<vmem>>, vector<4x1xf32>,
    %c0_i32_19 = arith.constant 0 : i32
    %21 = arith.cmpi eq, %arg2, %c0_i32_19 : i32
    %22 = arith.extui %21 : i1 to i32
    %c0_i32_20 = arith.constant 0 : i32
    %23 = arith.cmpi ne, %22, %c0_i32_20 : i32
    scf.if %23 {
      %c0_21 = arith.constant 0 : index
      %c0_22 = arith.constant 0 : index
      %24 = vector.load %arg7[%c0_21, %c0_22] : memref<4x1xf32, #tpu.memory_space<vmem>>, vector<4x1xf32>
      %c0_23 = arith.constant 0 : index
      %c0_24 = arith.constant 0 : index
      %c0_25 = arith.constant 0 : index
      %c0_26 = arith.constant 0 : index
      %25 = vector.load %arg5[%c0_23, %c0_24, %c0_25, %c0_26] : memref<1x1x4x1xf32, #tpu.memory_space<vmem>>, vector<1x1x4x1xf32>
      %26 = vector.shape_cast %25 : vector<1x1x4x1xf32> to vector<4x1xf32>
      %27 = vector.shape_cast %24 : vector<4x1xf32> to vector<1x1x4x1xf32>
      tpu.vector_store %arg5[%c0_23, %c0_24, %c0_25, %c0_26], %27 {strides = array<i32>} : memref<1x1x4x1xf32, #tpu.memory_space<vmem>>, vector<1x1x4x1xf32>,
      %c0_27 = arith.constant 0 : index
      %c0_28 = arith.constant 0 : index
      %28 = vector.load %arg8[%c0_27, %c0_28] : memref<4x1xf32, #tpu.memory_space<vmem>>, vector<4x1xf32>
      %c0_29 = arith.constant 0 : index
      %c0_30 = arith.constant 0 : index
      %c0_31 = arith.constant 0 : index
      %c0_32 = arith.constant 0 : index
      %29 = vector.load %arg6[%c0_29, %c0_30, %c0_31, %c0_32] : memref<1x1x4x1xf32, #tpu.memory_space<vmem>>, vector<1x1x4x1xf32>
      %30 = vector.shape_cast %29 : vector<1x1x4x1xf32> to vector<4x1xf32>
      %31 = vector.shape_cast %28 : vector<4x1xf32> to vector<1x1x4x1xf32>
      tpu.vector_store %arg6[%c0_29, %c0_30, %c0_31, %c0_32], %31 {strides = array<i32>} : memref<1x1x4x1xf32, #tpu.memory_space<vmem>>, vector<1x1x4x1xf32>,
    } else {
    }
    return
  }
  func.func @transform_0(%arg0: i32, %arg1: i32, %arg2: i32) -> (i32, i32, i32, i32) {
    %c1_i32 = arith.constant 1 : i32
    %0 = arith.muli %arg1, %c1_i32 : i32
    %1 = arith.addi %0, %arg2 : i32
    %c0_i32 = arith.constant 0 : i32
    %c0_i32_0 = arith.constant 0 : i32
    %c0_i32_1 = arith.constant 0 : i32
    return %arg0, %c0_i32, %1, %c0_i32_0 : i32, i32, i32, i32
  }
  func.func @transform_1(%arg0: i32, %arg1: i32, %arg2: i32) -> (i32, i32, i32, i32) {
    %c1_i32 = arith.constant 1 : i32
    %0 = arith.muli %arg1, %c1_i32 : i32
    %1 = arith.addi %0, %arg2 : i32
    %c0_i32 = arith.constant 0 : i32
    %c0_i32_0 = arith.constant 0 : i32
    %c0_i32_1 = arith.constant 0 : i32
    return %arg0, %c0_i32, %1, %c0_i32_0 : i32, i32, i32, i32
  }
  func.func @transform_2(%arg0: i32, %arg1: i32, %arg2: i32) -> (i32, i32, i32, i32) {
    %c0_i32 = arith.constant 0 : i32
    %c0_i32_0 = arith.constant 0 : i32
    %c0_i32_1 = arith.constant 0 : i32
    return %arg0, %arg1, %c0_i32, %c0_i32_0 : i32, i32, i32, i32
  }
  func.func @transform_3(%arg0: i32, %arg1: i32, %arg2: i32) -> (i32, i32, i32, i32) {
    %c0_i32 = arith.constant 0 : i32
    %c0_i32_0 = arith.constant 0 : i32
    %c0_i32_1 = arith.constant 0 : i32
    return %arg0, %arg1, %c0_i32, %c0_i32_0 : i32, i32, i32, i32
  }
}

</mosaic_0001>

<llo_original>
// kernel: ergas.1
$region0: #{ergas.1}
  #allocation0 [shape = 'u32[]', space=smem, size = 0x4, offset = 0x4, fixed_abs, tag = 'smem constant byte address 0x4 - core index']
  #allocation1 [shape = 'u32[144,128]{1,0:T(1,128)}', space=vmem, size = 0x12000, scoped, tag = 'internal scratch']
  #allocation2 [shape = 'f32[4,1]{1,0:T(4,128)}', space=vmem, size = 0x800, scoped, tag = 'scratch operand']
  #allocation3 [shape = 'f32[4,1]{1,0:T(4,128)}', space=vmem, size = 0x800, scoped, tag = 'scratch operand']
  %s0 = inlined_call_operand.hbm [shape: f32[2,4,16,16], index: 0, kind: input, shape index: {}]
  %s1 = inlined_call_operand.hbm [shape: f32[2,4,16,16], index: 1, kind: input, shape index: {}]
  %s2 = inlined_call_operand.vmem [shape: f32[2,2,4,1], index: 2, kind: output, shape index: {0}]
  %s3 = inlined_call_operand.vmem [shape: f32[2,2,4,1], index: 3, kind: output, shape index: {1}]
  %4 = xla_tuple %s2, %s3
  %s5 = sld [smem:[#allocation0]]
  $region65: #{ergas.1} parent=0
    _
  %s7 = ssub.s32 1, %s5
  %s8 = scalar_select 0, %s7, %s5
  $region1: #{ergas.1} parent=0
    #allocation4 [shape = 'u8[32768]{0}', space=vmem, size = 0x8000, scoped, tag = 'input window, operand 0']
    #allocation5 [shape = 's32[2]{0}', space=sflag, size = 0x8, scoped, tag = 'scoped memory for ergas.1']
    #allocation6 [shape = 'u8[32768]{0}', space=vmem, size = 0x8000, scoped, tag = 'input window, operand 1']
    #allocation7 [shape = 's32[2]{0}', space=sflag, size = 0x8, scoped, tag = 'scoped memory for ergas.1']
    %9 = vsyncpa [#allocation5], 0
    %s10 = scalar_lea.sflag [#allocation5], 1
    %11 = vsyncpa %s10, 0
    %12 = vsyncpa [#allocation7], 0
    %s13 = scalar_lea.sflag [#allocation7], 1
    %14 = vsyncpa %s13, 0
    loop: start=0, step=1, limit=6
    $region2: #{ergas.1} parent=1 // loop_pre_header
      _
    $region3: #{ergas.1} parent=1 // loop_header
      %s16 = sphi 0, %s20
      %p17 = scmp.ge.s32.totalorder %s16, 6
      %s23 = sphi 0, %s42
      %s24 = sphi 0, %s38
      %s25 = sphi 0, %s34
      %s26 = sphi 0, %s23
      %s27 = sphi 0, %s24
      %s28 = sphi 0, %s25
      %s29 = sphi 0, %s26
      %s30 = sphi 0, %s27
      %s31 = sphi 0, %s28
      %s49 = sphi 0, %s51
      %s52 = sphi 0, %s49
      %s53 = sphi 0, %s52
      %s69 = sphi 0, %s53
      %s79 = sphi 0, %s81
      %s82 = sphi 0, %s79
      %s83 = sphi 0, %s82
      %s99 = sphi 0, %s83
      %s107 = sphi 0, %s109
      %s110 = sphi 0, %s107
      %s111 = sphi 0, %s110
      %s127 = sphi 0, %s111
      %s135 = sphi 0, %s137
      %s138 = sphi 0, %s135
      %s139 = sphi 0, %s138
      %s155 = sphi 0, %s139
    $region4: #{ergas.1} parent=1 // loop_header_branch
      %19 = sbr.rel (%p17) target = $region8
    $region5: #{ergas.1} parent=1 // loop_body
      %s21 = ssub.s32 %s16, 1
      %s22 = ssub.s32 %s16, 2
      %s32 = sadd.s32 1, %s25
      %p33 = scmp.ge.s32.totalorder %s32, 1
      %s34 = scalar_select %p33, 0, %s32
      %s35 = sadd.s32 1, %s24
      %s36 = scalar_select %p33, %s35, %s24
      %p37 = scmp.ge.s32.totalorder %s36, 2
      %s38 = scalar_select %p37, 0, %s36
      %s39 = sadd.s32 1, %s23
      %s40 = scalar_select %p37, %s39, %s23
      %p41 = scmp.ge.s32.totalorder %s40, 2
      %s42 = scalar_select %p41, 0, %s40
      %s43 = sadd.s32 %s24, %s25
      %s44 = sadd.s32 %s38, %s34
      %s45 = ssub.s32 %s23, %s42
      %s46 = ssub.s32 %s43, %s44
      %s47 = sor.u32 %s45, %s46
      %p48 = scmp.eq.s32.totalorder %s47, 0
      %s50 = sadd.s32 %s49, 1
      %s51 = scalar_select %p48, %s49, %s50
      %p54 = pneg %p48
      %p55 = scmp.eq.s32.totalorder %s16, 3
      %p56 = por %p54, %p55
      %p57 = scmp.ne.s32.totalorder %s49, %s52
      %p58 = scmp.eq.s32.totalorder %s16, 0
      %p59 = por %p57, %p58
      %p60 = scmp.ne.s32.totalorder %s49, %s52
      %p61 = scmp.eq.s32.totalorder %s21, 3
      %p62 = por %p60, %p61
      %p63 = scmp.ne.s32.totalorder %s52, %s53
      %p64 = scmp.eq.s32.totalorder %s21, 0
      %p65 = por %p63, %p64
      %p66 = scmp.ne.s32.totalorder %s52, %s53
      %p67 = scmp.eq.s32.totalorder %s22, 3
      %p68 = por %p66, %p67
      %p70 = scmp.ne.s32.totalorder %s53, %s69
      %p71 = scmp.eq.s32.totalorder %s22, 0
      %p72 = por %p70, %p71
      %s73 = sadd.s32 %s24, %s25
      %s74 = sadd.s32 %s38, %s34
      %s75 = ssub.s32 %s23, %s42
      %s76 = ssub.s32 %s73, %s74
      %s77 = sor.u32 %s75, %s76
      %p78 = scmp.eq.s32.totalorder %s77, 0
      %s80 = sadd.s32 %s79, 1
      %s81 = scalar_select %p78, %s79, %s80
      %p84 = pneg %p78
      %p85 = scmp.eq.s32.totalorder %s16, 3
      %p86 = por %p84, %p85
      %p87 = scmp.ne.s32.totalorder %s79, %s82
      %p88 = scmp.eq.s32.totalorder %s16, 0
      %p89 = por %p87, %p88
      %p90 = scmp.ne.s32.totalorder %s79, %s82
      %p91 = scmp.eq.s32.totalorder %s21, 3
      %p92 = por %p90, %p91
      %p93 = scmp.ne.s32.totalorder %s82, %s83
      %p94 = scmp.eq.s32.totalorder %s21, 0
      %p95 = por %p93, %p94
      %p96 = scmp.ne.s32.totalorder %s82, %s83
      %p97 = scmp.eq.s32.totalorder %s22, 3
      %p98 = por %p96, %p97
      %p100 = scmp.ne.s32.totalorder %s83, %s99
      %p101 = scmp.eq.s32.totalorder %s22, 0
      %p102 = por %p100, %p101
      %s103 = ssub.s32 %s23, %s42
      %s104 = ssub.s32 %s24, %s38
      %s105 = sor.u32 %s103, %s104
      %p106 = scmp.eq.s32.totalorder %s105, 0
      %s108 = sadd.s32 %s107, 1
      %s109 = scalar_select %p106, %s107, %s108
      %p112 = pneg %p106
      %p113 = scmp.eq.s32.totalorder %s16, 3
      %p114 = por %p112, %p113
      %p115 = scmp.ne.s32.totalorder %s107, %s110
      %p116 = scmp.eq.s32.totalorder %s16, 0
      %p117 = por %p115, %p116
      %p118 = scmp.ne.s32.totalorder %s107, %s110
      %p119 = scmp.eq.s32.totalorder %s21, 3
      %p120 = por %p118, %p119
      %p121 = scmp.ne.s32.totalorder %s110, %s111
      %p122 = scmp.eq.s32.totalorder %s21, 0
      %p123 = por %p121, %p122
      %p124 = scmp.ne.s32.totalorder %s110, %s111
      %p125 = scmp.eq.s32.totalorder %s22, 3
      %p126 = por %p124, %p125
      %p128 = scmp.ne.s32.totalorder %s111, %s127
      %p129 = scmp.eq.s32.totalorder %s22, 0
      %p130 = por %p128, %p129
      %s131 = ssub.s32 %s23, %s42
      %s132 = ssub.s32 %s24, %s38
      %s133 = sor.u32 %s131, %s132
      %p134 = scmp.eq.s32.totalorder %s133, 0
      %s136 = sadd.s32 %s135, 1
      %s137 = scalar_select %p134, %s135, %s136
      %p140 = pneg %p134
      %p141 = scmp.eq.s32.totalorder %s16, 3
      %p142 = por %p140, %p141
      %p143 = scmp.ne.s32.totalorder %s135, %s138
      %p144 = scmp.eq.s32.totalorder %s16, 0
      %p145 = por %p143, %p144
      %p146 = scmp.ne.s32.totalorder %s135, %s138
      %p147 = scmp.eq.s32.totalorder %s21, 3
      %p148 = por %p146, %p147
      %p149 = scmp.ne.s32.totalorder %s138, %s139
      %p150 = scmp.eq.s32.totalorder %s21, 0
      %p151 = por %p149, %p150
      %p152 = scmp.ne.s32.totalorder %s138, %s139
      %p153 = scmp.eq.s32.totalorder %s22, 3
      %p154 = por %p152, %p153
      %p156 = scmp.ne.s32.totalorder %s139, %s155
      %p157 = scmp.eq.s32.totalorder %s22, 0
      %p158 = por %p156, %p157
      %p159 = scmp.le.s32.totalorder 1, %s16
      %p160 = scmp.lt.s32.totalorder %s16, 5
      %p161 = pnand %p159, %p160
      %p162 = pneg %p161
      // Predicated region
      $region9: #{ergas.1} parent=5 // pred_check
        _
      $region10: #{ergas.1} parent=5 // pred_check_branch
        %164 = sbr.rel (%p161) target = $region12
      $region11: #{ergas.1} parent=5 // pred_region
        %s165 = ssub.s32 %s16, 1
      $region12: #{ergas.1} parent=5 // pred_fallthru
        _
      %p166 = scmp.lt.s32.totalorder %s16, 4
      // Predicated region
      $region13: #{ergas.1} parent=5 // pred_check
        %p167 = pneg %p166
      $region14: #{ergas.1} parent=5 // pred_check_branch
        %169 = sbr.rel (%p167) target = $region16
      $region15: #{ergas.1} parent=5 // pred_region
        // Predicated region
        $region17: #{ergas.1} parent=15 // pred_check
          %p170 = pneg %p59
        $region18: #{ergas.1} parent=15 // pred_check_branch
          %172 = sbr.rel (%p170) target = $region20
        $region19: #{ergas.1} parent=15 // pred_region
          %s173 = sand.u32 %s49, 1
          %s174 = scalar_lea.sflag [#allocation5], %s173
          %s175 = sand.u32 %s49, 1
          %s176 = smul.addr %s175, 32
          %s177 = scalar_lea.vmem [#allocation4], %s176
          %s178 = sadd.s32 %s24, %s25
          %s180 = ssub.s32 512, 512
          %181 = vsyncadd %s174, %s180
          %s182 = smul.addr %s23, 8
          %s183 = sadd.s32 %s178, %s182
          %s184 = smul.addr %s183, 128
          %s185 = scalar_lea.hbm %s0, %s184
          %s186 = sshll.u32 %s177, 4
          %s187 = int_to_ptr.vmem [resolvable:$true] %s186
          %192 = dma.hbm_to_vmem [thread:$0]  %s185, 512, %s187, %s174, 256, 128, 8
        $region20: #{ergas.1} parent=15 // pred_fallthru
          _
        // Predicated region
        $region21: #{ergas.1} parent=15 // pred_check
          %p193 = pneg %p89
        $region22: #{ergas.1} parent=15 // pred_check_branch
          %195 = sbr.rel (%p193) target = $region24
        $region23: #{ergas.1} parent=15 // pred_region
          %s196 = sand.u32 %s79, 1
          %s197 = scalar_lea.sflag [#allocation7], %s196
          %s198 = sand.u32 %s79, 1
          %s199 = smul.addr %s198, 32
          %s200 = scalar_lea.vmem [#allocation6], %s199
          %s201 = sadd.s32 %s24, %s25
          %s203 = ssub.s32 512, 512
          %204 = vsyncadd %s197, %s203
          %s205 = smul.addr %s23, 8
          %s206 = sadd.s32 %s201, %s205
          %s207 = smul.addr %s206, 128
          %s208 = scalar_lea.hbm %s1, %s207
          %s209 = sshll.u32 %s200, 4
          %s210 = int_to_ptr.vmem [resolvable:$true] %s209
          %215 = dma.hbm_to_vmem [thread:$0]  %s208, 512, %s210, %s197, 256, 128, 8
        $region24: #{ergas.1} parent=15 // pred_fallthru
          _
      $region16: #{ergas.1} parent=5 // pred_fallthru
        _
      %p216 = scmp.le.s32.totalorder 1, %s16
      %p217 = scmp.lt.s32.totalorder %s16, 5
      %p218 = pnand %p216, %p217
      %p219 = pneg %p218
      // Predicated region
      $region25: #{ergas.1} parent=5 // pred_check
        _
      $region26: #{ergas.1} parent=5 // pred_check_branch
        %221 = sbr.rel (%p218) target = $region28
      $region27: #{ergas.1} parent=5 // pred_region
        %s222 = ssub.s32 %s16, 1
        %s223 = sand.u32 %s52, 1
        %s224 = scalar_lea.sflag [#allocation5], %s223
        %s225 = sand.u32 %s52, 1
        %s226 = smul.addr %s225, 32
        %s227 = scalar_lea.vmem [#allocation4], %s226
        // Predicated region
        $region29: #{ergas.1} parent=27 // pred_check
          %p228 = pneg %p65
        $region30: #{ergas.1} parent=27 // pred_check_branch
          %230 = sbr.rel (%p228) target = $region32
        $region31: #{ergas.1} parent=27 // pred_region
          %231 = dma.done %s224, 512
        $region32: #{ergas.1} parent=27 // pred_fallthru
          _
        %s232 = sand.u32 %s82, 1
        %s233 = scalar_lea.sflag [#allocation7], %s232
        %s234 = sand.u32 %s82, 1
        %s235 = smul.addr %s234, 32
        %s236 = scalar_lea.vmem [#allocation6], %s235
        // Predicated region
        $region33: #{ergas.1} parent=27 // pred_check
          %p237 = pneg %p95
        $region34: #{ergas.1} parent=27 // pred_check_branch
          %239 = sbr.rel (%p237) target = $region36
        $region35: #{ergas.1} parent=27 // pred_region
          %240 = dma.done %s233, 512
        $region36: #{ergas.1} parent=27 // pred_fallthru
          _
        %s241 = sand.u32 %s52, 1
        %s242 = scalar_lea.sflag [#allocation5], %s241
        %s243 = sand.u32 %s52, 1
        %s244 = smul.addr %s243, 32
        %s245 = scalar_lea.vmem [#allocation4], %s244
        %p246 = pneg %p65
        %p247 = pneg %p62
        %s248 = sand.u32 %s82, 1
        %s249 = scalar_lea.sflag [#allocation7], %s248
        %s250 = sand.u32 %s82, 1
        %s251 = smul.addr %s250, 32
        %s252 = scalar_lea.vmem [#allocation6], %s251
        %p253 = pneg %p95
        %p254 = pneg %p92
        %p255 = pneg %p123
        %p256 = pneg %p120
        %p257 = scmp.lt.s32.totalorder %s26, 1
        %s258 = scalar_select %p257, %s26, 1
        %p259 = scmp.lt.s32.totalorder %s27, 1
        %s260 = scalar_select %p259, %s27, 1
        %s261 = smul.addr %s258, 2
        %s262 = sadd.s32 %s260, %s261
        %s263 = smul.addr %s262, 4
        %s264 = scalar_lea.vmem %s2, %s263
        %p265 = pneg %p151
        %p266 = pneg %p148
        %p267 = scmp.lt.s32.totalorder %s26, 1
        %s268 = scalar_select %p267, %s26, 1
        %p269 = scmp.lt.s32.totalorder %s27, 1
        %s270 = scalar_select %p269, %s27, 1
        %s271 = smul.addr %s268, 2
        %s272 = sadd.s32 %s270, %s271
        %s273 = smul.addr %s272, 4
        %s274 = scalar_lea.vmem %s3, %s273
        %s275 = sadd.s32 %s27, %s28
        %s276 = sadd.s32 %s27, %s28
        %p277 = scmp.lt.s32.totalorder %s26, 1
        %s278 = scalar_select %p277, %s26, 1
        %p279 = scmp.lt.s32.totalorder %s27, 1
        %s280 = scalar_select %p279, %s27, 1
        %s281 = smul.addr %s278, 2
        %s282 = sadd.s32 %s280, %s281
        %s283 = smul.addr %s282, 4
        %s284 = scalar_lea.vmem %s2, %s283
        %p285 = scmp.lt.s32.totalorder %s26, 1
        %s286 = scalar_select %p285, %s26, 1
        %p287 = scmp.lt.s32.totalorder %s27, 1
        %s288 = scalar_select %p287, %s27, 1
        %s289 = smul.addr %s286, 2
        %s290 = sadd.s32 %s288, %s289
        %s291 = smul.addr %s290, 4
        %s292 = scalar_lea.vmem %s3, %s291
        %p293 = scmp.eq.s32.totalorder %s28, 0
        // Predicated region
        $region37: #{ergas.1} parent=27 // pred_check
          %p294 = pneg %p293
        $region38: #{ergas.1} parent=27 // pred_check_branch
          %296 = sbr.rel (%p294) target = $region40
        $region39: #{ergas.1} parent=27 // pred_region
          %vm297 = vcmask 3072
          %298 = vst.msk [vmem:[#allocation2] sm:$0xf] %vm297, 0.0
          %299 = vst.msk [vmem:[#allocation3] sm:$0xf] %vm297, 0.0
        $region40: #{ergas.1} parent=27 // pred_fallthru
          _
        %v300 = vld [vmem:[%s227] sm:$0xff]
        %v301 = vld [vmem:[%s227 + $0x8] sm:$0xff]
        %v302 = vld [vmem:[%s227 + $0x10] sm:$0xff]
        %v303 = vld [vmem:[%s227 + $0x18] sm:$0xff]
        %v304 = vld [vmem:[%s236] sm:$0xff]
        %v305 = vld [vmem:[%s236 + $0x8] sm:$0xff]
        %v306 = vld [vmem:[%s236 + $0x10] sm:$0xff]
        %v307 = vld [vmem:[%s236 + $0x18] sm:$0xff]
        %v308 = vsub.f32 %v300, %v304
        %v309 = vsub.f32 %v301, %v305
        %v310 = vsub.f32 %v302, %v306
        %v311 = vsub.f32 %v303, %v307
        %v312 = vld [vmem:[#allocation2] sm:$0xf]
        %vm313 = vcmask 130048
        %v314 = vsel %vm313, %v304, 0.0
        %315 = vadd.xlane.f32.xlu0 %v314
        %v316 = vpop.xlane.xlu0 %315
        %v317 = vsel %vm313, %v305, 0.0
        %318 = vadd.xlane.f32.xlu0 %v317
        %v319 = vpop.xlane.xlu0 %318
        %v320 = vsel %vm313, %v306, 0.0
        %321 = vadd.xlane.f32.xlu0 %v320
        %v322 = vpop.xlane.xlu0 %321
        %v323 = vsel %vm313, %v307, 0.0
        %324 = vadd.xlane.f32.xlu0 %v323
        %v325 = vpop.xlane.xlu0 %324
        %v330 = vlaneseq
        %v331 = vand.u32 %v330, 127
        %v332 = vlaneseq
        %v333 = vshrl.u32 %v332, 7
        %v334 = vsub.s32 %v331, %v333
        %v335 = vrot.slane %v316, %v334
        %v336 = vlaneseq
        %v337 = vshrl.u32 %v336, 7
        %v338 = vsub.s32 %v331, %v337
        %v339 = vrot.slane %v319, %v338
        %v340 = vlaneseq
        %v341 = vshrl.u32 %v340, 7
        %v342 = vsub.s32 %v331, %v341
        %v343 = vrot.slane %v322, %v342
        %v344 = vlaneseq
        %v345 = vshrl.u32 %v344, 7
        %v346 = vsub.s32 %v331, %v345
        %v347 = vrot.slane %v325, %v346
        %vm348 = vcmask 1041409
        %v349 = vsel %vm348, %v339, %v335
        %vm350 = vcmask 1042434
        %v351 = vsel %vm350, %v343, %v349
        %vm352 = vcmask 1043459
        %v353 = vsel %vm352, %v347, %v351
        %vm355 = vcmask 60416
        %v356 = vsel %vm355, %v353, 0.0
        %357 = vadd.xlane.f32.xlu0 %v356
        %v358 = vpop.xlane.xlu0 %357
        %v359 = vadd.f32 %v312, %v358
        %vm360 = vcmask 3072
        %361 = vst.msk [vmem:[#allocation2] sm:$0xf] %vm360, %v359
        %v362 = vld [vmem:[#allocation3] sm:$0xf]
        %v363 = vmul.f32 %v308, %v308
        %v364 = vmul.f32 %v309, %v309
        %v365 = vmul.f32 %v310, %v310
        %v366 = vmul.f32 %v311, %v311
        %v367 = vsel %vm313, %v363, 0.0
        %368 = vadd.xlane.f32.xlu0 %v367
        %v369 = vpop.xlane.xlu0 %368
        %v370 = vsel %vm313, %v364, 0.0
        %371 = vadd.xlane.f32.xlu0 %v370
        %v372 = vpop.xlane.xlu0 %371
        %v373 = vsel %vm313, %v365, 0.0
        %374 = vadd.xlane.f32.xlu0 %v373
        %v375 = vpop.xlane.xlu0 %374
        %v376 = vsel %vm313, %v366, 0.0
        %377 = vadd.xlane.f32.xlu0 %v376
        %v378 = vpop.xlane.xlu0 %377
        %v383 = vlaneseq
        %v384 = vshrl.u32 %v383, 7
        %v385 = vsub.s32 %v331, %v384
        %v386 = vrot.slane %v369, %v385
        %v387 = vlaneseq
        %v388 = vshrl.u32 %v387, 7
        %v389 = vsub.s32 %v331, %v388
        %v390 = vrot.slane %v372, %v389
        %v391 = vlaneseq
        %v392 = vshrl.u32 %v391, 7
        %v393 = vsub.s32 %v331, %v392
        %v394 = vrot.slane %v375, %v393
        %v395 = vlaneseq
        %v396 = vshrl.u32 %v395, 7
        %v397 = vsub.s32 %v331, %v396
        %v398 = vrot.slane %v378, %v397
        %v399 = vsel %vm348, %v390, %v386
        %v400 = vsel %vm350, %v394, %v399
        %v401 = vsel %vm352, %v398, %v400
        %v403 = vsel %vm355, %v401, 0.0
        %404 = vadd.xlane.f32.xlu0 %v403
        %v405 = vpop.xlane.xlu0 %404
        %v406 = vadd.f32 %v362, %v405
        %407 = vst.msk [vmem:[#allocation3] sm:$0xf] %vm360, %v406
        // Predicated region
        $region41: #{ergas.1} parent=27 // pred_check
          %p408 = pneg %p293
        $region42: #{ergas.1} parent=27 // pred_check_branch
          %410 = sbr.rel (%p408) target = $region44
        $region43: #{ergas.1} parent=27 // pred_region
          %v411 = vld [vmem:[#allocation2] sm:$0xf]
          %412 = vst.msk [vmem:[%s284] sm:$0xf] %vm360, %v411
          %v413 = vld [vmem:[#allocation3] sm:$0xf]
          %414 = vst.msk [vmem:[%s292] sm:$0xf] %vm360, %v413
        $region44: #{ergas.1} parent=27 // pred_fallthru
          _
        %p415 = scmp.lt.s32.totalorder %s26, 1
        %s416 = scalar_select %p415, %s26, 1
        %p417 = scmp.lt.s32.totalorder %s27, 1
        %s418 = scalar_select %p417, %s27, 1
        %s419 = smul.addr %s416, 2
        %s420 = sadd.s32 %s418, %s419
        %s421 = smul.addr %s420, 4
        %s422 = scalar_lea.vmem %s2, %s421
        %p423 = scmp.lt.s32.totalorder %s26, 1
        %s424 = scalar_select %p423, %s26, 1
        %p425 = scmp.lt.s32.totalorder %s27, 1
        %s426 = scalar_select %p425, %s27, 1
        %s427 = smul.addr %s424, 2
        %s428 = sadd.s32 %s426, %s427
        %s429 = smul.addr %s428, 4
        %s430 = scalar_lea.vmem %s3, %s429
        // Predicated region
        $region45: #{ergas.1} parent=27 // pred_check
          %p431 = pneg %p120
        $region46: #{ergas.1} parent=27 // pred_check_branch
          %433 = sbr.rel (%p431) target = $region48
        $region47: #{ergas.1} parent=27 // pred_region
          _
        $region48: #{ergas.1} parent=27 // pred_fallthru
          _
        // Predicated region
        $region49: #{ergas.1} parent=27 // pred_check
          %p434 = pneg %p148
        $region50: #{ergas.1} parent=27 // pred_check_branch
          %436 = sbr.rel (%p434) target = $region52
        $region51: #{ergas.1} parent=27 // pred_region
          _
        $region52: #{ergas.1} parent=27 // pred_fallthru
          _
      $region28: #{ergas.1} parent=5 // pred_fallthru
        _
      %p437 = scmp.le.s32.totalorder 2, %s16
      // Predicated region
      $region53: #{ergas.1} parent=5 // pred_check
        %p438 = pneg %p437
      $region54: #{ergas.1} parent=5 // pred_check_branch
        %440 = sbr.rel (%p438) target = $region56
      $region55: #{ergas.1} parent=5 // pred_region
        %s441 = ssub.s32 %s16, 2
        // Predicated region
        $region57: #{ergas.1} parent=55 // pred_check
          %p442 = pneg %p126
        $region58: #{ergas.1} parent=55 // pred_check_branch
          %444 = sbr.rel (%p442) target = $region60
        $region59: #{ergas.1} parent=55 // pred_region
          %p445 = scmp.lt.s32.totalorder %s29, 1
          %s446 = scalar_select %p445, %s29, 1
          %p447 = scmp.lt.s32.totalorder %s30, 1
          %s448 = scalar_select %p447, %s30, 1
          %s449 = smul.addr %s446, 2
          %s450 = sadd.s32 %s448, %s449
          %s451 = smul.addr %s450, 4
          %s452 = scalar_lea.vmem %s2, %s451
        $region60: #{ergas.1} parent=55 // pred_fallthru
          _
        // Predicated region
        $region61: #{ergas.1} parent=55 // pred_check
          %p453 = pneg %p154
        $region62: #{ergas.1} parent=55 // pred_check_branch
          %455 = sbr.rel (%p453) target = $region64
        $region63: #{ergas.1} parent=55 // pred_region
          %p456 = scmp.lt.s32.totalorder %s29, 1
          %s457 = scalar_select %p456, %s29, 1
          %p458 = scmp.lt.s32.totalorder %s30, 1
          %s459 = scalar_select %p458, %s30, 1
          %s460 = smul.addr %s457, 2
          %s461 = sadd.s32 %s459, %s460
          %s462 = smul.addr %s461, 4
          %s463 = scalar_lea.vmem %s3, %s462
        $region64: #{ergas.1} parent=55 // pred_fallthru
          _
      $region56: #{ergas.1} parent=5 // pred_fallthru
        _
    $region6: #{ergas.1} parent=1 // loop_footer
      %s20 = sadd.s32 1, %s16
    $region7: #{ergas.1} parent=1 // loop_footer_branch
      %15 = sbr.rel target = $region3
    $region8: #{ergas.1} parent=1 // loop_exit
      _
    %464 = vsyncpa [#allocation5], 1
    %s465 = scalar_lea.sflag [#allocation5], 1
    %466 = vsyncpa %s465, 1
    %467 = vsyncpa [#allocation7], 1
    %s468 = scalar_lea.sflag [#allocation7], 1
    %469 = vsyncpa %s468, 1

</llo_original>
